<compile_context>
chip_gen: v5e
topology: v5e:2x2
jax: 0.10.0
libtpu: 0.0.40
codegen_flags: <defaults>
</compile_context>

<pallas_src>
import functools

import jax
import jax.numpy as jnp
from jax.experimental import pallas as pl
from jax.experimental.pallas import tpu as pltpu


def _round_up(x: int, m: int) -> int:
    return ((x + m - 1) // m) * m


def _choose_batch_tile(B: int, tile_b: int) -> int:
    """Pick the batch tile.

    Rules:
      * A block whose sublane dim is a multiple of 8, OR the full batch
        (a full-extent block is always legal), to satisfy the (8,128) rule.
      * Prefer large tiles (per-grid-step overhead ~0.35 us).
      * When the batch allows it, keep >= 2 grid steps so v7x's second
        TensorCore gets work (the grid axis is marked "parallel").
    """
    if B <= tile_b and (B < 16 or B % 8 != 0):
        # Small / odd batch: a single full-batch block is the simplest legal
        # choice (block dim equals the full array dim).
        return B
    tb = max(8, (min(tile_b, B) // 8) * 8)
    if B >= 16 and pl.cdiv(B, tb) < 2:
        # Split across (at least) two grid steps for v7x megacore sharding.
        tb = max(8, _round_up((B + 1) // 2, 8))
    return tb


def mlp_kernel(x_ref, w1_ref, b1_ref, w2_ref, b2_ref, out_ref):
    # Cast x to bf16 in-kernel (VPU is far from saturated) so HBM only ever
    # sees the original f32 x once.
    xb = x_ref[...].astype(jnp.bfloat16)
    # hidden = relu(x @ W1 + b1), accumulated in f32 on the MXU.
    h = jnp.dot(xb, w1_ref[...], preferred_element_type=jnp.float32)
    h = jnp.maximum(h + b1_ref[...], 0.0)                  # (tb, H) + (1, H)
    # out = hidden @ W2 + b2; hidden cast back to bf16 for the second MXU pass.
    o = jnp.dot(h.astype(jnp.bfloat16), w2_ref[...],
                preferred_element_type=jnp.float32)
    out_ref[...] = (o + b2_ref[...]).astype(out_ref.dtype)


def prepare_params(w1, b1, w2, b2):
    """One-time parameter prep (hoisted out of the per-call path):
    bf16 weights for the MXU, f32 biases for the f32 accumulators."""
    return (w1.astype(jnp.bfloat16), b1.astype(jnp.float32),
            w2.astype(jnp.bfloat16), b2.astype(jnp.float32))


@functools.partial(jax.jit, static_argnames=("tile_b",))
def neural_net_forward(x, w1, b1, w2, b2, *, tile_b: int = 512):
    """x: (B, input_size) f32; w1: (input_size, hidden) bf16; b1: (1, hidden) f32;
       w2: (hidden, output) bf16; b2: (1, output) f32.  Returns (B, output) f32."""
    B, I = x.shape
    H = w1.shape[1]
    O = w2.shape[1]

    tb = _choose_batch_tile(B, tile_b)
    grid = (pl.cdiv(B, tb),)

    cost = pl.CostEstimate(
        flops=2 * B * (I * H + H * O),
        transcendentals=0,
        bytes_accessed=(B * I * x.dtype.itemsize
                        + I * H * w1.dtype.itemsize
                        + H * b1.dtype.itemsize
                        + H * O * w2.dtype.itemsize
                        + O * b2.dtype.itemsize
                        + B * O * 4),
    )

    return pl.pallas_call(
        mlp_kernel,
        out_shape=jax.ShapeDtypeStruct((B, O), jnp.float32),
        grid=grid,
        in_specs=[
            pl.BlockSpec((tb, I), lambda i: (i, 0)),   # x: tiled over batch
            pl.BlockSpec((I, H), lambda i: (0, 0)),    # W1: VMEM-resident
            pl.BlockSpec((1, H), lambda i: (0, 0)),    # b1: VMEM-resident
            pl.BlockSpec((H, O), lambda i: (0, 0)),    # W2: VMEM-resident
            pl.BlockSpec((1, O), lambda i: (0, 0)),    # b2: VMEM-resident
        ],
        out_specs=pl.BlockSpec((tb, O), lambda i: (i, 0)),  # narrow (B, O) f32
        compiler_params=pltpu.CompilerParams(
            dimension_semantics=("parallel",),
        ),
        cost_estimate=cost,
    )(x, w1, b1, w2, b2)


def reference_forward_bf16(x, w1, b1, w2, b2):
    """Mirrors the kernel's numerics: bf16 matmul inputs, f32 accumulation."""
    xb = x.astype(jnp.bfloat16)
    w1b = w1.astype(jnp.bfloat16)
    w2b = w2.astype(jnp.bfloat16)
    h = jnp.dot(xb, w1b, preferred_element_type=jnp.float32) + b1
    h = jnp.maximum(h, 0.0)
    return jnp.dot(h.astype(jnp.bfloat16), w2b,
                   preferred_element_type=jnp.float32) + b2


def reference_forward_f32(x, w1, b1, w2, b2):
    h = jnp.maximum(x @ w1 + b1, 0.0)
    return h @ w2 + b2


if __name__ == "__main__":
    # Small shapes consistent with the module: input_size=64, hidden=32,
    # output=16, batch=8.
    batch, input_size, hidden_size, output_size = 8, 64, 32, 16

    key = jax.random.PRNGKey(0)
    kx, k1, kb1, k2, kb2 = jax.random.split(key, 5)

    x = jax.random.normal(kx, (batch, input_size), dtype=jnp.float32)
    bound1 = 1.0 / (input_size ** 0.5)
    w1 = jax.random.uniform(k1, (input_size, hidden_size),
                            minval=-bound1, maxval=bound1, dtype=jnp.float32)
    b1 = jax.random.uniform(kb1, (1, hidden_size),
                            minval=-bound1, maxval=bound1, dtype=jnp.float32)
    bound2 = 1.0 / (hidden_size ** 0.5)
    w2 = jax.random.uniform(k2, (hidden_size, output_size),
                            minval=-bound2, maxval=bound2, dtype=jnp.float32)
    b2 = jax.random.uniform(kb2, (1, output_size),
                            minval=-bound2, maxval=bound2, dtype=jnp.float32)

    # One-time parameter prep (bf16 weights / f32 biases), outside the jitted
    # per-call path.
    w1p, b1p, w2p, b2p = prepare_params(w1, b1, w2, b2)

    out = neural_net_forward(x, w1p, b1p, w2p, b2p)
    out = jax.block_until_ready(out)
    assert out.shape == (batch, output_size)

    # Tight check against a reference that uses the same bf16/f32 numerics.
    ref_bf16 = reference_forward_bf16(x, w1, b1, w2, b2)
    assert jnp.allclose(out, ref_bf16, atol=1e-3, rtol=1e-3), (
        jnp.max(jnp.abs(out - ref_bf16)))

    # Loose sanity check against the pure-f32 reference (bf16 rounding only).
    # TODO(synk): if exact f32 parity with the PyTorch module is required,
    # switch the in-kernel dots to f32 inputs (slower, still memory-bound).
    ref_f32 = reference_forward_f32(x, w1, b1, w2, b2)
    assert jnp.allclose(out, ref_f32, atol=5e-2, rtol=5e-2), (
        jnp.max(jnp.abs(out - ref_f32)))

    print("KERNEL_OK")
</pallas_src>

<mosaic_0001>
module attributes {stable_mosaic.version = 11 : i64} {
  func.func @mlp_kernel(%arg0: i32, %arg1: memref<8x64xf32, #tpu.memory_space<vmem>>, %arg2: memref<64x32xbf16, #tpu.memory_space<vmem>>, %arg3: memref<1x32xf32, #tpu.memory_space<vmem>>, %arg4: memref<32x16xbf16, #tpu.memory_space<vmem>>, %arg5: memref<1x16xf32, #tpu.memory_space<vmem>>, %arg6: memref<8x16xf32, #tpu.memory_space<vmem>>) attributes {dimension_semantics = [#tpu.dimension_semantics<parallel>], iteration_bounds = array<i64: 1>, scalar_prefetch = 0 : i64, scratch_operands = 0 : i64, tpu.core_type = #tpu.core_type<tc>, window_params = [{transform_indices = @transform_0, window_bounds = array<i64: 8, 64>}, {pipeline_mode = #tpu.pipeline_mode<synchronous>, transform_indices = @transform_1, window_bounds = array<i64: 64, 32>}, {pipeline_mode = #tpu.pipeline_mode<synchronous>, transform_indices = @transform_2, window_bounds = array<i64: 1, 32>}, {pipeline_mode = #tpu.pipeline_mode<synchronous>, transform_indices = @transform_3, window_bounds = array<i64: 32, 16>}, {pipeline_mode = #tpu.pipeline_mode<synchronous>, transform_indices = @transform_4, window_bounds = array<i64: 1, 16>}, {transform_indices = @transform_5, window_bounds = array<i64: 8, 16>}]} {
    %c0 = arith.constant 0 : index
    %c0_0 = arith.constant 0 : index
    %0 = vector.load %arg1[%c0, %c0_0] : memref<8x64xf32, #tpu.memory_space<vmem>>, vector<8x64xf32>
    %1 = arith.truncf %0 : vector<8x64xf32> to vector<8x64xbf16>
    %c0_1 = arith.constant 0 : index
    %c0_2 = arith.constant 0 : index
    %2 = vector.load %arg2[%c0_1, %c0_2] : memref<64x32xbf16, #tpu.memory_space<vmem>>, vector<64x32xbf16>
    %cst = arith.constant dense<0.000000e+00> : vector<8x32xf32>
    %3 = tpu.matmul %1, %2, %cst {dimension_numbers = #tpu.dot_dimension_numbers<[1], [0], [0], [1], [0, 0, 1, 1], [], []>} : vector<8x64xbf16>, vector<64x32xbf16>, vector<8x32xf32> -> vector<8x32xf32>
    %c0_3 = arith.constant 0 : index
    %c0_4 = arith.constant 0 : index
    %4 = vector.load %arg3[%c0_3, %c0_4] : memref<1x32xf32, #tpu.memory_space<vmem>>, vector<1x32xf32>
    %5 = vector.broadcast %4 : vector<1x32xf32> to vector<8x32xf32>
    %6 = arith.addf %3, %5 : vector<8x32xf32>
    %cst_5 = arith.constant 0.000000e+00 : f32
    %7 = vector.broadcast %cst_5 : f32 to vector<8x32xf32>
    %8 = arith.maximumf %6, %7 : vector<8x32xf32>
    %9 = arith.truncf %8 : vector<8x32xf32> to vector<8x32xbf16>
    %c0_6 = arith.constant 0 : index
    %c0_7 = arith.constant 0 : index
    %10 = vector.load %arg4[%c0_6, %c0_7] : memref<32x16xbf16, #tpu.memory_space<vmem>>, vector<32x16xbf16>
    %cst_8 = arith.constant dense<0.000000e+00> : vector<8x16xf32>
    %11 = tpu.matmul %9, %10, %cst_8 {dimension_numbers = #tpu.dot_dimension_numbers<[1], [0], [0], [1], [0, 0, 1, 1], [], []>} : vector<8x32xbf16>, vector<32x16xbf16>, vector<8x16xf32> -> vector<8x16xf32>
    %c0_9 = arith.constant 0 : index
    %c0_10 = arith.constant 0 : index
    %12 = vector.load %arg5[%c0_9, %c0_10] : memref<1x16xf32, #tpu.memory_space<vmem>>, vector<1x16xf32>
    %13 = vector.broadcast %12 : vector<1x16xf32> to vector<8x16xf32>
    %14 = arith.addf %11, %13 : vector<8x16xf32>
    %c0_11 = arith.constant 0 : index
    %c0_12 = arith.constant 0 : index
    %15 = vector.load %arg6[%c0_11, %c0_12] : memref<8x16xf32, #tpu.memory_space<vmem>>, vector<8x16xf32>
    tpu.vector_store %arg6[%c0_11, %c0_12], %14 {strides = array<i32>} : memref<8x16xf32, #tpu.memory_space<vmem>>, vector<8x16xf32>,
    return
  }
  func.func @transform_0(%arg0: i32) -> (i32, i32) {
    %c0_i32 = arith.constant 0 : i32
    %c0_i32_0 = arith.constant 0 : i32
    return %arg0, %c0_i32 : i32, i32
  }
  func.func @transform_1(%arg0: i32) -> (i32, i32) {
    %c0_i32 = arith.constant 0 : i32
    %c0_i32_0 = arith.constant 0 : i32
    %c0_i32_1 = arith.constant 0 : i32
    return %c0_i32, %c0_i32_0 : i32, i32
  }
  func.func @transform_2(%arg0: i32) -> (i32, i32) {
    %c0_i32 = arith.constant 0 : i32
    %c0_i32_0 = arith.constant 0 : i32
    %c0_i32_1 = arith.constant 0 : i32
    return %c0_i32, %c0_i32_0 : i32, i32
  }
  func.func @transform_3(%arg0: i32) -> (i32, i32) {
    %c0_i32 = arith.constant 0 : i32
    %c0_i32_0 = arith.constant 0 : i32
    %c0_i32_1 = arith.constant 0 : i32
    return %c0_i32, %c0_i32_0 : i32, i32
  }
  func.func @transform_4(%arg0: i32) -> (i32, i32) {
    %c0_i32 = arith.constant 0 : i32
    %c0_i32_0 = arith.constant 0 : i32
    %c0_i32_1 = arith.constant 0 : i32
    return %c0_i32, %c0_i32_0 : i32, i32
  }
  func.func @transform_5(%arg0: i32) -> (i32, i32) {
    %c0_i32 = arith.constant 0 : i32
    %c0_i32_0 = arith.constant 0 : i32
    return %arg0, %c0_i32 : i32, i32
  }
}

</mosaic_0001>

<llo_original>
// kernel: neural_net_forward.1
$region0: #{neural_net_forward.1}
  #allocation0 [shape = 'u32[]', space=smem, size = 0x4, offset = 0x4, fixed_abs, tag = 'smem constant byte address 0x4 - core index']
  #allocation1 [shape = 'u32[72,128]{1,0:T(1,128)}', space=vmem, size = 0x9000, scoped, tag = 'internal scratch']
  %s0 = inlined_call_operand.vmem [shape: f32[8,64], index: 0, kind: input, shape index: {}]
  %s1 = inlined_call_operand.vmem [shape: bf16[64,32], index: 1, kind: input, shape index: {}]
  %s2 = inlined_call_operand.vmem [shape: f32[1,32], index: 2, kind: input, shape index: {}]
  %s3 = inlined_call_operand.vmem [shape: bf16[32,16], index: 3, kind: input, shape index: {}]
  %s4 = inlined_call_operand.vmem [shape: f32[1,16], index: 4, kind: input, shape index: {}]
  %s5 = inlined_call_operand.hbm [shape: f32[8,16], index: 5, kind: output, shape index: {}]
  %s6 = sld [smem:[#allocation0]]
  $region30: #{neural_net_forward.1} parent=0
    _
  %s8 = ssub.s32 1, %s6
  %s9 = scalar_select 0, %s8, %s6
  $region1: #{neural_net_forward.1} parent=0
    #allocation2 [shape = 'u8[4096]{0}', space=vmem, size = 0x1000, scoped, tag = 'output window, operand 0, single buffered']
    #allocation3 [shape = 's32[1]{0}', space=sflag, size = 0x4, scoped, tag = 'scoped memory for neural_net_forward.1']
    %10 = vsyncpa [#allocation3], 0
    // Predicated region
    $region2: #{neural_net_forward.1} parent=1 // pred_check
      _
    $region3: #{neural_net_forward.1} parent=1 // pred_check_branch
      %12 = sbr.rel (0) target = $region5
    $region4: #{neural_net_forward.1} parent=1 // pred_region
      _
    $region5: #{neural_net_forward.1} parent=1 // pred_fallthru
      _
    // Predicated region
    $region6: #{neural_net_forward.1} parent=1 // pred_check
      _
    $region7: #{neural_net_forward.1} parent=1 // pred_check_branch
      %14 = sbr.rel (0) target = $region9
    $region8: #{neural_net_forward.1} parent=1 // pred_region
      _
    $region9: #{neural_net_forward.1} parent=1 // pred_fallthru
      _
    // Predicated region
    $region10: #{neural_net_forward.1} parent=1 // pred_check
      _
    $region11: #{neural_net_forward.1} parent=1 // pred_check_branch
      %16 = sbr.rel (0) target = $region13
    $region12: #{neural_net_forward.1} parent=1 // pred_region
      _
    $region13: #{neural_net_forward.1} parent=1 // pred_fallthru
      _
    // Predicated region
    $region14: #{neural_net_forward.1} parent=1 // pred_check
      _
    $region15: #{neural_net_forward.1} parent=1 // pred_check_branch
      %18 = sbr.rel (0) target = $region17
    $region16: #{neural_net_forward.1} parent=1 // pred_region
      _
    $region17: #{neural_net_forward.1} parent=1 // pred_fallthru
      _
    // Predicated region
    $region18: #{neural_net_forward.1} parent=1 // pred_check
      _
    $region19: #{neural_net_forward.1} parent=1 // pred_check_branch
      %20 = sbr.rel (0) target = $region21
    $region20: #{neural_net_forward.1} parent=1 // pred_region
      _
    $region21: #{neural_net_forward.1} parent=1 // pred_fallthru
      _
    %v22 = vld [vmem:[%s0] sm:$0xff]
    %v23 = vpack.c.bf16 %v22, %v22
    %v24 = vld [vmem:[%s1] sm:$0xf]
    %v25 = vld [vmem:[%s1 + $0x4] sm:$0xf]
    %v26 = vld [vmem:[%s1 + $0x8] sm:$0xf]
    %v27 = vld [vmem:[%s1 + $0xc] sm:$0xf]
    %v28 = vld [vmem:[%s1 + $0x10] sm:$0xf]
    %v29 = vld [vmem:[%s1 + $0x14] sm:$0xf]
    %v30 = vld [vmem:[%s1 + $0x18] sm:$0xf]
    %v31 = vld [vmem:[%s1 + $0x1c] sm:$0xf]
    %v32 = vld [vmem:[%s2] sm:$0x1]
    %v34 = vperm.slane %v32, 0
    %v44 = vunpack.c.l.b16 %v24
    %v45 = vunpack.c.l.b16 %v25
    %v46 = vunpack.c.l.b16 %v26
    %v47 = vunpack.c.l.b16 %v27
    %v48 = vunpack.c.l.b16 %v28
    %v49 = vunpack.c.l.b16 %v29
    %v50 = vunpack.c.l.b16 %v30
    %v51 = vunpack.c.l.b16 %v31
    %v52 = vpack.c.b16 %v45, %v44
    %v53 = vpack.c.b16 %v47, %v46
    %v54 = vpack.c.b16 %v49, %v48
    %v55 = vpack.c.b16 %v51, %v50
    %vm60 = vcmask 523264
    %v62 = vsel %vm60, %v23, 0
    %64 = vmatpush.bf16.msra.mxu0 0
    %65 = vmatpush.bf16.msra.mxu0 0
    %66 = vmatpush.bf16.msra.mxu0 0
    %67 = vmatpush.bf16.msra.mxu0 0
    %68 = vmatpush.bf16.msra.mxu0 %v55
    %69 = vmatpush.bf16.msra.mxu0 %v54
    %70 = vmatpush.bf16.msra.mxu0 %v53
    %71 = vmatpush.bf16.msra.mxu0 %v52
    %72 = vmatmul.bf16.gmra.mxu0 %v62
    %v73 = vpop.f32.mrf.mxu0
    %v74 = vadd.f32 %v34, %v73
    %v75 = vpop.f32.mrf.mxu0
    %76 = vdwg.mxu0
    %v77 = vmax.f32 %v74, 0.0
    %v78 = vpack.c.bf16 %v77, %v77
    %v79 = vld [vmem:[%s3] sm:$0xf]
    %v80 = vld [vmem:[%s3 + $0x4] sm:$0xf]
    %v81 = vld [vmem:[%s3 + $0x8] sm:$0xf]
    %v82 = vld [vmem:[%s3 + $0xc] sm:$0xf]
    %v83 = vld [vmem:[%s4] sm:$0x1]
    %v85 = vperm.slane %v83, 0
    %v91 = vunpack.c.l.b16 %v79
    %v92 = vunpack.c.l.b16 %v80
    %v93 = vunpack.c.l.b16 %v81
    %v94 = vunpack.c.l.b16 %v82
    %v95 = vpack.c.b16 %v92, %v91
    %v96 = vpack.c.b16 %v94, %v93
    %vm99 = vcmask 261120
    %v101 = vsel %vm99, %v78, 0
    %103 = vmatpush.bf16.msra.mxu0 0
    %104 = vmatpush.bf16.msra.mxu0 0
    %105 = vmatpush.bf16.msra.mxu0 0
    %106 = vmatpush.bf16.msra.mxu0 0
    %107 = vmatpush.bf16.msra.mxu0 0
    %108 = vmatpush.bf16.msra.mxu0 0
    %109 = vmatpush.bf16.msra.mxu0 %v96
    %110 = vmatpush.bf16.msra.mxu0 %v95
    %111 = vmatmul.bf16.gmra.mxu0 %v101
    %v112 = vpop.f32.mrf.mxu0
    %v113 = vadd.f32 %v85, %v112
    %v114 = vpop.f32.mrf.mxu0
    %115 = vdwg.mxu0
    %vm116 = vcmask 130048
    %117 = vst.msk [vmem:[#allocation2] sm:$0xff] %vm116, %v113
    // Predicated region
    $region22: #{neural_net_forward.1} parent=1 // pred_check
      _
    $region23: #{neural_net_forward.1} parent=1 // pred_check_branch
      %119 = sbr.rel (0) target = $region25
    $region24: #{neural_net_forward.1} parent=1 // pred_region
      %121 = vsyncadd [#allocation3], 0
      %s123 = sshll.u32 [#allocation2], 4
      %s124 = int_to_ptr.vmem [resolvable:$true] %s123
      %s125 = sshll.u32 %s5, 4
      %s126 = int_to_ptr.hbm [resolvable:$true] %s125
      %128 = dma.vmem_to_hbm [thread:$0]  %s124, 128, %s126, [#allocation3]
    $region25: #{neural_net_forward.1} parent=1 // pred_fallthru
      _
    // Predicated region
    $region26: #{neural_net_forward.1} parent=1 // pred_check
      _
    $region27: #{neural_net_forward.1} parent=1 // pred_check_branch
      %130 = sbr.rel (0) target = $region29
    $region28: #{neural_net_forward.1} parent=1 // pred_region
      %132 = dma.done [#allocation3], 128
    $region29: #{neural_net_forward.1} parent=1 // pred_fallthru
      _
    %133 = vsyncpa [#allocation3], 1

</llo_original>
